<compile_context>
chip_gen: v7x
topology: tpu7x:2x2x1
jax: 0.10.0
libtpu: 0.0.40
codegen_flags: <defaults>
</compile_context>

<pallas_src>
import functools

import jax
import jax.numpy as jnp
from jax.experimental import pallas as pl
from jax.experimental.pallas import tpu as pltpu

BETA = 2.0
INIT_TH = 0.0625


def _round_up(x, m):
    return (x + m - 1) // m * m


def _cdiv(a, b):
    return (a + b - 1) // b


def _choose_layout(total):
    """Lane-dense 2-D slab (rows, lane_w) plus a fixed row-tile size.

    rows is padded up to a multiple of block_rows (padding is inert: zeros
    never fire since 0 < init_th), so there is no tiny-tile fallback and every
    streamed spike tile is ~1 MiB (f32).
    """
    lane_w = 512 if total >= 512 * 8 else 128
    rows_min = _round_up(_cdiv(total, lane_w), 8)
    target_tile_bytes = 1 << 20  # ~1 MiB stream tiles: safe on v7x, good on v5e/v6e
    block_rows = max(8, min(1024, (target_tile_bytes // (lane_w * 4)) // 8 * 8))
    block_rows = min(block_rows, rows_min)
    rows = _round_up(rows_min, block_rows)
    return lane_w, rows * lane_w, rows, block_rows


def _burst_kernel(data_ref, out_ref, mem_ref, th_ref, acc_ref, flag_ref,
                  *, beta, init_th):
    # data_ref : (rows, lane_w) VMEM-resident input (constant index_map -> one HBM DMA total).
    # out_ref  : (block_rows, lane_w) spike tile for timestep t (squeezed t dim).
    # mem_ref, th_ref : (rows, lane_w) persistent VMEM state.
    # acc_ref  : (8, lane_w) per-timestep any-fire vector accumulator.
    # flag_ref : SMEM int32[1] -- 1 iff nothing fired anywhere at the previous timestep.
    t = pl.program_id(0)
    j = pl.program_id(1)
    n_tiles = pl.num_programs(1)

    block_rows = out_ref.shape[0]
    lane_w = out_ref.shape[1]
    row0 = pl.multiple_of(j * block_rows, block_rows)
    rs = pl.ds(row0, block_rows)

    @pl.when(jnp.logical_and(t == 0, j == 0))
    def _init_flag():
        flag_ref[0] = jnp.int32(0)          # no deferred reset pending

    @pl.when(j == 0)
    def _reset_acc():
        acc_ref[...] = jnp.zeros_like(acc_ref)

    is_t0 = t == 0
    need_data = jnp.logical_or(is_t0, flag_ref[0] == 1)

    # Branch-free init / deferred global-reset via vreg selects (no extra
    # VMEM store + dependent reload on the init / reset paths).  At t == 0 the
    # selects fully mask the uninitialized mem/th scratch.
    data = data_ref[rs, :]
    mem = jnp.where(need_data, data, mem_ref[rs, :])
    th = jnp.where(is_t0, init_th, th_ref[rs, :])

    fire = mem >= th
    mem_ref[rs, :] = jnp.where(fire, mem - th, mem)
    th_ref[rs, :] = jnp.where(fire, th * beta, init_th)
    out_ref[...] = fire.astype(out_ref.dtype)

    # Fold the row tile onto an (8, lane_w) vreg strip: elementwise VPU maxes
    # only, no cross-lane reduce and no vector->SMEM handoff per tile.
    tile_max = jnp.max(fire.astype(jnp.float32).reshape(block_rows // 8, 8, lane_w),
                       axis=0)
    acc = jnp.maximum(acc_ref[...], tile_max)
    acc_ref[...] = acc

    @pl.when(j == n_tiles - 1)
    def _finalize_timestep():
        # Single cross-lane reduce per timestep; the global "nothing fired"
        # result is consumed as a deferred mem = data reset at timestep t + 1.
        flag_ref[0] = (jnp.max(acc) == 0.0).astype(jnp.int32)


def burst_forward(x, num_steps, *, beta=BETA, init_th=INIT_TH,
                  out_dtype=jnp.float32):
    """Run all `num_steps` BURST timesteps in one fused pallas_call.

    Returns spikes of shape (num_steps,) + x.shape, dtype `out_dtype`
    (values are exactly 0/1, so bf16 is a lossless, cheaper choice).
    """
    orig_shape = x.shape
    total = int(x.size)
    lane_w, padded, rows, block_rows = _choose_layout(total)
    n_tiles = rows // block_rows

    data_flat = x.astype(jnp.float32).reshape(-1)
    if padded != total:
        # Zero padding never fires (0 < init_th): inert for the global
        # any-fire reduction and for the state updates.
        data_flat = jnp.pad(data_flat, (0, padded - total))
    data2d = data_flat.reshape(rows, lane_w)

    out_itemsize = jnp.dtype(out_dtype).itemsize
    slab_bytes = rows * lane_w * 4
    state_bytes = 2 * slab_bytes                               # mem + th (persistent)
    data_bytes = 2 * slab_bytes                                # resident input (worst case 2 bufs)
    stream_bytes = 2 * block_rows * lane_w * out_itemsize      # spike writeback, double-buffered
    acc_bytes = 8 * lane_w * 4
    need = state_bytes + data_bytes + stream_bytes + acc_bytes

    try:
        vmem_cap = int(pltpu.get_tpu_info().vmem_capacity_bytes)
    except Exception:
        vmem_cap = 64 * 1024 * 1024  # conservative per-TensorCore capacity (v7x)

    headroom = 4 * 1024 * 1024
    if need + headroom > vmem_cap:
        # TODO(synk): HBM-streamed mem/th fallback (input_output_aliases) +
        # predicated pl.ANY data DMA + two-TensorCore tile sharding for
        # activations that do not fit VMEM-resident state.
        raise ValueError(
            f"BURST activation too large for VMEM-resident state: need "
            f"{need} bytes (+{headroom} headroom), capacity {vmem_cap} bytes.")
    vmem_limit = int(min(vmem_cap, max(need + headroom, 16 * 1024 * 1024)))

    kernel = functools.partial(_burst_kernel, beta=float(beta),
                               init_th=float(init_th))

    out = pl.pallas_call(
        kernel,
        out_shape=jax.ShapeDtypeStruct((num_steps, rows, lane_w), out_dtype),
        grid_spec=pltpu.PrefetchScalarGridSpec(
            num_scalar_prefetch=0,
            grid=(num_steps, n_tiles),
            in_specs=[
                # Constant block index -> the input is DMA'd HBM->VMEM exactly
                # once and stays resident; no per-timestep re-streaming.
                pl.BlockSpec((rows, lane_w), lambda t, j: (0, 0)),
            ],
            # TODO(synk): sweep pipeline_mode=pl.Buffered(3) here once the spike
            # writeback is the only HBM stream.
            out_specs=pl.BlockSpec((None, block_rows, lane_w),
                                   lambda t, j: (t, j, 0)),
            scratch_shapes=[
                pltpu.VMEM((rows, lane_w), jnp.float32),   # mem state
                pltpu.VMEM((rows, lane_w), jnp.float32),   # th state
                pltpu.VMEM((8, lane_w), jnp.float32),      # any-fire accumulator
                pltpu.SMEM((1,), jnp.int32),               # deferred-reset flag
            ],
        ),
        compiler_params=pltpu.CompilerParams(
            dimension_semantics=("arbitrary", "arbitrary"),
            vmem_limit_bytes=vmem_limit,
        ),
    )(data2d)

    if padded != total:
        # NOTE: this slice materializes an extra pass over the output; shapes
        # whose element count is a multiple of 8*lane_w avoid it entirely.
        out = out.reshape(num_steps, padded)[:, :total]
    return out.reshape((num_steps,) + tuple(orig_shape))


class BurstJAX:
    """JAX/Pallas port of the stateful BURST nn.Module.

    All `num_steps` timesteps are computed in one fused pallas_call on first
    use of a given input tensor; subsequent calls serve cached slices.  The
    cache is keyed on (t == 0) OR input identity, so feeding a different
    tensor mid-sequence recomputes instead of returning stale spikes.
    """

    def __init__(self, beta=BETA, init_th=INIT_TH, num_steps=8,
                 out_dtype=jnp.float32):
        self.beta = float(beta)
        self.init_th = float(init_th)
        self.num_steps = int(num_steps)
        self.out_dtype = out_dtype
        self._outs = None
        self._cached_x = None

    def __call__(self, x, t):
        if t == 0 or self._outs is None or x is not self._cached_x:
            self._outs = burst_forward(x, self.num_steps, beta=self.beta,
                                       init_th=self.init_th,
                                       out_dtype=self.out_dtype)
            self._cached_x = x
        return self._outs[t]


def _burst_reference(x, num_steps, beta=BETA, init_th=INIT_TH):
    """Pure-JAX reference mirroring the PyTorch semantics."""
    data = x.astype(jnp.float32)
    mem = data
    th = jnp.full_like(data, init_th)
    outs = []
    for t in range(num_steps):
        if t == 0:
            mem = data
            th = jnp.full_like(data, init_th)
        fire = mem >= th
        out = jnp.where(fire, 1.0, 0.0).astype(jnp.float32)
        mem = mem - jnp.where(fire, th, 0.0)
        th = jnp.where(fire, th * beta, init_th)
        mem = jnp.where(jnp.max(out) > 0.0, mem, data)
        outs.append(out)
    return jnp.stack(outs, axis=0)


if __name__ == "__main__":
    N, C, H, W = 2, 4, 16, 16
    T = 6

    # Case 1: image-like inputs in [0, 1).
    x1 = jax.random.uniform(jax.random.PRNGKey(0), (N, C, H, W), dtype=jnp.float32)

    # Case 2: engineered to hit the global "no spike anywhere -> mem = data"
    # reset path (0.07 fires at t=0, nothing fires at t=1, fires again at t=2).
    mask = jax.random.uniform(jax.random.PRNGKey(1), (N, C, H, W)) > 0.5
    x2 = jnp.where(mask, 0.07, 0.03).astype(jnp.float32)

    # Case 3: odd-sized input exercising the padded-layout path.
    x3 = jax.random.uniform(jax.random.PRNGKey(2), (1, 3, 7, 9), dtype=jnp.float32)

    ok = True
    for x in (x1, x2, x3):
        want = _burst_reference(x, T)
        got = jax.block_until_ready(burst_forward(x, T))
        if got.shape != want.shape or not bool(jnp.array_equal(got, want)):
            ok = False
            break
        # bf16 spike output is lossless for 0/1 and halves the HBM writeback.
        got_bf16 = jax.block_until_ready(
            burst_forward(x, T, out_dtype=jnp.bfloat16))
        if not bool(jnp.array_equal(got_bf16.astype(jnp.float32), want)):
            ok = False
            break

    # Also exercise the stateful PyTorch-like interface.
    if ok:
        burst = BurstJAX(beta=BETA, init_th=INIT_TH, num_steps=T)
        ref1 = _burst_reference(x1, T)
        for t in range(T):
            out_t = jax.block_until_ready(burst(x1, t))
            if not bool(jnp.array_equal(out_t, ref1[t])):
                ok = False
                break

    print("KERNEL_OK" if ok else "MISMATCH")
</pallas_src>

<mosaic_0001>
module attributes {stable_mosaic.version = 11 : i64} {
  func.func @_burst_kernel(%arg0: i32, %arg1: i32, %arg2: memref<16x128xf32, #tpu.memory_space<vmem>>, %arg3: memref<1x16x128xf32, #tpu.memory_space<vmem>>, %arg4: memref<16x128xf32, #tpu.memory_space<vmem>>, %arg5: memref<16x128xf32, #tpu.memory_space<vmem>>, %arg6: memref<8x128xf32, #tpu.memory_space<vmem>>, %arg7: memref<1xi32, #tpu.memory_space<smem>>) attributes {dimension_semantics = [#tpu.dimension_semantics<arbitrary>, #tpu.dimension_semantics<arbitrary>], iteration_bounds = array<i64: 6, 1>, scalar_prefetch = 0 : i64, scratch_operands = 4 : i64, tpu.core_type = #tpu.core_type<tc>, window_params = [{pipeline_mode = #tpu.pipeline_mode<synchronous>, transform_indices = @transform_0, window_bounds = array<i64: 16, 128>}, {transform_indices = @transform_1, window_bounds = array<i64: 1, 16, 128>}]} {
    %c16_i32 = arith.constant 16 : i32
    %0 = arith.muli %arg1, %c16_i32 : i32
    %1 = tpu.assume_multiple %0, 16 : i32
    %c0_i32 = arith.constant 0 : i32
    %2 = arith.cmpi eq, %arg0, %c0_i32 : i32
    %c0_i32_0 = arith.constant 0 : i32
    %3 = arith.cmpi eq, %arg1, %c0_i32_0 : i32
    %4 = arith.andi %2, %3 : i1
    %5 = arith.extui %4 : i1 to i32
    %c0_i32_1 = arith.constant 0 : i32
    %6 = arith.cmpi ne, %5, %c0_i32_1 : i32
    scf.if %6 {
      %c0_i32_22 = arith.constant 0 : i32
      %c0_23 = arith.constant 0 : index
      %49 = memref.load %arg7[%c0_23] : memref<1xi32, #tpu.memory_space<smem>>
      memref.store %c0_i32_22, %arg7[%c0_23] : memref<1xi32, #tpu.memory_space<smem>>
    } else {
    }
    %c0_i32_2 = arith.constant 0 : i32
    %7 = arith.cmpi eq, %arg1, %c0_i32_2 : i32
    %8 = arith.extui %7 : i1 to i32
    %c0_i32_3 = arith.constant 0 : i32
    %9 = arith.cmpi ne, %8, %c0_i32_3 : i32
    scf.if %9 {
      %cst_22 = arith.constant 0.000000e+00 : f32
      %49 = vector.broadcast %cst_22 : f32 to vector<8x128xf32>
      %c0_23 = arith.constant 0 : index
      %c0_24 = arith.constant 0 : index
      %50 = vector.load %arg6[%c0_23, %c0_24] : memref<8x128xf32, #tpu.memory_space<vmem>>, vector<8x128xf32>
      tpu.vector_store %arg6[%c0_23, %c0_24], %49 {strides = array<i32>} : memref<8x128xf32, #tpu.memory_space<vmem>>, vector<8x128xf32>,
    } else {
    }
    %c0_i32_4 = arith.constant 0 : i32
    %10 = arith.cmpi eq, %arg0, %c0_i32_4 : i32
    %c0 = arith.constant 0 : index
    %11 = memref.load %arg7[%c0] : memref<1xi32, #tpu.memory_space<smem>>
    %c1_i32 = arith.constant 1 : i32
    %12 = arith.cmpi eq, %11, %c1_i32 : i32
    %13 = arith.ori %10, %12 : i1
    %14 = arith.index_cast %1 : i32 to index
    %c0_5 = arith.constant 0 : index
    %15 = vector.load %arg2[%14, %c0_5] : memref<16x128xf32, #tpu.memory_space<vmem>>, vector<16x128xf32>
    %16 = arith.index_cast %1 : i32 to index
    %c0_6 = arith.constant 0 : index
    %17 = vector.load %arg4[%16, %c0_6] : memref<16x128xf32, #tpu.memory_space<vmem>>, vector<16x128xf32>
    %18 = arith.select %13, %15, %17 : vector<16x128xf32>
    %19 = arith.index_cast %1 : i32 to index
    %c0_7 = arith.constant 0 : index
    %20 = vector.load %arg5[%19, %c0_7] : memref<16x128xf32, #tpu.memory_space<vmem>>, vector<16x128xf32>
    %cst = arith.constant 6.250000e-02 : f32
    %21 = vector.broadcast %cst : f32 to vector<16x128xf32>
    %22 = arith.select %10, %21, %20 : vector<16x128xf32>
    %23 = arith.cmpf oge, %18, %22 : vector<16x128xf32>
    %24 = arith.subf %18, %22 : vector<16x128xf32>
    %25 = arith.select %23, %24, %18 : vector<16x128xi1>, vector<16x128xf32>
    %26 = arith.index_cast %1 : i32 to index
    %c0_8 = arith.constant 0 : index
    %27 = vector.load %arg4[%26, %c0_8] : memref<16x128xf32, #tpu.memory_space<vmem>>, vector<16x128xf32>
    tpu.vector_store %arg4[%26, %c0_8], %25 {strides = array<i32>} : memref<16x128xf32, #tpu.memory_space<vmem>>, vector<16x128xf32>,
    %cst_9 = arith.constant 2.000000e+00 : f32
    %28 = vector.broadcast %cst_9 : f32 to vector<16x128xf32>
    %29 = arith.mulf %22, %28 : vector<16x128xf32>
    %cst_10 = arith.constant 6.250000e-02 : f32
    %30 = vector.broadcast %cst_10 : f32 to vector<16x128xf32>
    %31 = arith.select %23, %29, %30 : vector<16x128xi1>, vector<16x128xf32>
    %32 = arith.index_cast %1 : i32 to index
    %c0_11 = arith.constant 0 : index
    %33 = vector.load %arg5[%32, %c0_11] : memref<16x128xf32, #tpu.memory_space<vmem>>, vector<16x128xf32>
    tpu.vector_store %arg5[%32, %c0_11], %31 {strides = array<i32>} : memref<16x128xf32, #tpu.memory_space<vmem>>, vector<16x128xf32>,
    %34 = arith.extui %23 : vector<16x128xi1> to vector<16x128xi32>
    %35 = arith.sitofp %34 : vector<16x128xi32> to vector<16x128xf32>
    %c0_12 = arith.constant 0 : index
    %c0_13 = arith.constant 0 : index
    %c0_14 = arith.constant 0 : index
    %36 = vector.load %arg3[%c0_12, %c0_13, %c0_14] : memref<1x16x128xf32, #tpu.memory_space<vmem>>, vector<1x16x128xf32>
    %37 = vector.shape_cast %36 : vector<1x16x128xf32> to vector<16x128xf32>
    %38 = vector.shape_cast %35 : vector<16x128xf32> to vector<1x16x128xf32>
    tpu.vector_store %arg3[%c0_12, %c0_13, %c0_14], %38 {strides = array<i32>} : memref<1x16x128xf32, #tpu.memory_space<vmem>>, vector<1x16x128xf32>,
    %39 = arith.extui %23 : vector<16x128xi1> to vector<16x128xi32>
    %40 = arith.sitofp %39 : vector<16x128xi32> to vector<16x128xf32>
    %41 = vector.shape_cast %40 : vector<16x128xf32> to vector<2x8x128xf32>
    %cst_15 = arith.constant dense<0xFF800000> : vector<8x128xf32>
    %42 = vector.multi_reduction <maximumf>, %41, %cst_15 [0] : vector<2x8x128xf32> to vector<8x128xf32>
    %c0_16 = arith.constant 0 : index
    %c0_17 = arith.constant 0 : index
    %43 = vector.load %arg6[%c0_16, %c0_17] : memref<8x128xf32, #tpu.memory_space<vmem>>, vector<8x128xf32>
    %44 = arith.maximumf %43, %42 : vector<8x128xf32>
    %c0_18 = arith.constant 0 : index
    %c0_19 = arith.constant 0 : index
    %45 = vector.load %arg6[%c0_18, %c0_19] : memref<8x128xf32, #tpu.memory_space<vmem>>, vector<8x128xf32>
    tpu.vector_store %arg6[%c0_18, %c0_19], %44 {strides = array<i32>} : memref<8x128xf32, #tpu.memory_space<vmem>>, vector<8x128xf32>,
    %c0_i32_20 = arith.constant 0 : i32
    %46 = arith.cmpi eq, %arg1, %c0_i32_20 : i32
    %47 = arith.extui %46 : i1 to i32
    %c0_i32_21 = arith.constant 0 : i32
    %48 = arith.cmpi ne, %47, %c0_i32_21 : i32
    scf.if %48 {
      %49 = vector.shape_cast %44 : vector<8x128xf32> to vector<1x8x128xf32>
      %cst_22 = arith.constant dense<0xFF800000> : vector<1xf32>
      %50 = vector.multi_reduction <maximumf>, %49, %cst_22 [1, 2] : vector<1x8x128xf32> to vector<1xf32>
      %51 = vector.shape_cast %50 : vector<1xf32> to vector<1x1x1xf32>
      %52 = vector.extract %51[0, 0, 0] : f32 from vector<1x1x1xf32>
      %cst_23 = arith.constant 0.000000e+00 : f32
      %53 = arith.cmpf oeq, %52, %cst_23 : f32
      %54 = arith.extui %53 : i1 to i32
      %c0_24 = arith.constant 0 : index
      %55 = memref.load %arg7[%c0_24] : memref<1xi32, #tpu.memory_space<smem>>
      memref.store %54, %arg7[%c0_24] : memref<1xi32, #tpu.memory_space<smem>>
    } else {
    }
    return
  }
  func.func @transform_0(%arg0: i32, %arg1: i32) -> (i32, i32) {
    %c0_i32 = arith.constant 0 : i32
    %c0_i32_0 = arith.constant 0 : i32
    %c0_i32_1 = arith.constant 0 : i32
    return %c0_i32, %c0_i32_0 : i32, i32
  }
  func.func @transform_1(%arg0: i32, %arg1: i32) -> (i32, i32, i32) {
    %c0_i32 = arith.constant 0 : i32
    %c0_i32_0 = arith.constant 0 : i32
    return %arg0, %arg1, %c0_i32 : i32, i32, i32
  }
}

</mosaic_0001>

<llo_original>
// kernel: tpu_custom_call.1
$region0: #{tpu_custom_call.1}
  #allocation0 [shape = 'u32[]', space=smem, size = 0x4, offset = 0x4, fixed_abs, tag = 'smem constant byte address 0x4 - core index']
  #allocation1 [shape = 'u32[144,128]{1,0:T(1,128)}', space=vmem, size = 0x12000, scoped, tag = 'internal scratch']
  #allocation2 [shape = 'f32[16,128]{1,0:T(8,128)}', space=vmem, size = 0x2000, scoped, tag = 'scratch operand']
  #allocation3 [shape = 'f32[16,128]{1,0:T(8,128)}', space=vmem, size = 0x2000, scoped, tag = 'scratch operand']
  #allocation4 [shape = 'f32[8,128]{1,0:T(8,128)}', space=vmem, size = 0x1000, scoped, tag = 'scratch operand']
  #allocation5 [shape = 's32[1]{0:T(128)}', space=smem, size = 0x200, scoped, tag = 'scratch operand']
  %s0 = inlined_call_operand.hbm [shape: f32[16,128], index: 0, kind: input, shape index: {}]
  %s1 = inlined_call_operand.hbm [shape: f32[6,16,128], index: 1, kind: output, shape index: {}]
  %s2 = sld [smem:[#allocation0]]
  $region53: #{tpu_custom_call.1} parent=0
    _
  %s4 = ssub.s32 1, %s2
  %s5 = scalar_select 0, %s4, %s2
  $region1: #{tpu_custom_call.1} parent=0
    #allocation6 [shape = 'u8[8192]{0}', space=vmem, size = 0x2000, scoped, tag = 'input window, operand 0, single buffered']
    #allocation7 [shape = 's32[2]{0}', space=sflag, size = 0x8, scoped, tag = 'scoped memory for tpu_custom_call.1']
    #allocation8 [shape = 's32[2]{0}', space=sflag, size = 0x8, scoped, tag = 'scoped memory for tpu_custom_call.1']
    #allocation9 [shape = 'u8[16384]{0}', space=vmem, size = 0x4000, scoped, tag = 'output window, operand 0']
    %6 = vsyncpa [#allocation7], 0
    %7 = vsyncpa [#allocation8], 0
    %s8 = scalar_lea.sflag [#allocation8], 1
    %9 = vsyncpa %s8, 0
    loop: start=0, step=1, limit=8
    $region2: #{tpu_custom_call.1} parent=1 // loop_pre_header
      _
    $region3: #{tpu_custom_call.1} parent=1 // loop_header
      %s11 = sphi 0, %s15
      %p12 = scmp.ge.s32.totalorder %s11, 8
      %s18 = sphi 0, %s30
      %s19 = sphi 0, %s26
      %s20 = sphi 0, %s18
      %s21 = sphi 0, %s19
      %s22 = sphi 0, %s20
      %s23 = sphi 0, %s21
      %s31 = sphi 0, %s31
      %s33 = sphi 0, %s31
      %s34 = sphi 0, %s33
      %s48 = sphi 0, %s34
      %s56 = sphi 0, %s58
      %s59 = sphi 0, %s56
      %s60 = sphi 0, %s59
      %s76 = sphi 0, %s60
    $region4: #{tpu_custom_call.1} parent=1 // loop_header_branch
      %14 = sbr.rel (%p12) target = $region8
    $region5: #{tpu_custom_call.1} parent=1 // loop_body
      %s16 = ssub.s32 %s11, 1
      %s17 = ssub.s32 %s11, 2
      %s24 = sadd.s32 1, %s19
      %p25 = scmp.ge.s32.totalorder %s24, 1
      %s26 = scalar_select %p25, 0, %s24
      %s27 = sadd.s32 1, %s18
      %s28 = scalar_select %p25, %s27, %s18
      %p29 = scmp.ge.s32.totalorder %s28, 6
      %s30 = scalar_select %p29, 0, %s28
      %s32 = sadd.s32 %s31, 1
      %p35 = scmp.eq.s32.totalorder %s11, 5
      %p36 = scmp.ne.s32.totalorder %s31, %s33
      %p37 = scmp.eq.s32.totalorder %s11, 0
      %p38 = por %p36, %p37
      %p39 = scmp.ne.s32.totalorder %s31, %s33
      %p40 = scmp.eq.s32.totalorder %s16, 5
      %p41 = por %p39, %p40
      %p42 = scmp.ne.s32.totalorder %s33, %s34
      %p43 = scmp.eq.s32.totalorder %s16, 0
      %p44 = por %p42, %p43
      %p45 = scmp.ne.s32.totalorder %s33, %s34
      %p46 = scmp.eq.s32.totalorder %s17, 5
      %p47 = por %p45, %p46
      %p49 = scmp.ne.s32.totalorder %s34, %s48
      %p50 = scmp.eq.s32.totalorder %s17, 0
      %p51 = por %p49, %p50
      %s52 = ssub.s32 %s18, %s30
      %s53 = ssub.s32 %s19, %s26
      %s54 = sor.u32 %s52, %s53
      %p55 = scmp.eq.s32.totalorder %s54, 0
      %s57 = sadd.s32 %s56, 1
      %s58 = scalar_select %p55, %s56, %s57
      %p61 = pneg %p55
      %p62 = scmp.eq.s32.totalorder %s11, 5
      %p63 = por %p61, %p62
      %p64 = scmp.ne.s32.totalorder %s56, %s59
      %p65 = scmp.eq.s32.totalorder %s11, 0
      %p66 = por %p64, %p65
      %p67 = scmp.ne.s32.totalorder %s56, %s59
      %p68 = scmp.eq.s32.totalorder %s16, 5
      %p69 = por %p67, %p68
      %p70 = scmp.ne.s32.totalorder %s59, %s60
      %p71 = scmp.eq.s32.totalorder %s16, 0
      %p72 = por %p70, %p71
      %p73 = scmp.ne.s32.totalorder %s59, %s60
      %p74 = scmp.eq.s32.totalorder %s17, 5
      %p75 = por %p73, %p74
      %p77 = scmp.ne.s32.totalorder %s60, %s76
      %p78 = scmp.eq.s32.totalorder %s17, 0
      %p79 = por %p77, %p78
      %p80 = scmp.le.s32.totalorder 1, %s11
      %p81 = scmp.lt.s32.totalorder %s11, 7
      %p82 = pnand %p80, %p81
      %p83 = pneg %p82
      // Predicated region
      $region9: #{tpu_custom_call.1} parent=5 // pred_check
        _
      $region10: #{tpu_custom_call.1} parent=5 // pred_check_branch
        %85 = sbr.rel (%p82) target = $region12
      $region11: #{tpu_custom_call.1} parent=5 // pred_region
        %s86 = ssub.s32 %s11, 1
        // Predicated region
        $region13: #{tpu_custom_call.1} parent=11 // pred_check
          %p87 = pneg %p44
        $region14: #{tpu_custom_call.1} parent=11 // pred_check_branch
          %89 = sbr.rel (%p87) target = $region16
        $region15: #{tpu_custom_call.1} parent=11 // pred_region
          %s91 = ssub.s32 256, 256
          %92 = vsyncadd [#allocation7], %s91
          %s93 = sshll.u32 [#allocation6], 4
          %s94 = int_to_ptr.vmem [resolvable:$true] %s93
          %99 = dma.hbm_to_vmem [thread:$0]  %s0, 256, %s94, [#allocation7], 128, 128, 8
        $region16: #{tpu_custom_call.1} parent=11 // pred_fallthru
          _
      $region12: #{tpu_custom_call.1} parent=5 // pred_fallthru
        _
      %p100 = scmp.lt.s32.totalorder %s11, 6
      // Predicated region
      $region17: #{tpu_custom_call.1} parent=5 // pred_check
        %p101 = pneg %p100
      $region18: #{tpu_custom_call.1} parent=5 // pred_check_branch
        %103 = sbr.rel (%p101) target = $region20
      $region19: #{tpu_custom_call.1} parent=5 // pred_region
        _
      $region20: #{tpu_custom_call.1} parent=5 // pred_fallthru
        _
      %p104 = scmp.le.s32.totalorder 1, %s11
      %p105 = scmp.lt.s32.totalorder %s11, 7
      %p106 = pnand %p104, %p105
      %p107 = pneg %p106
      // Predicated region
      $region21: #{tpu_custom_call.1} parent=5 // pred_check
        _
      $region22: #{tpu_custom_call.1} parent=5 // pred_check_branch
        %109 = sbr.rel (%p106) target = $region24
      $region23: #{tpu_custom_call.1} parent=5 // pred_region
        %s110 = ssub.s32 %s11, 1
        // Predicated region
        $region25: #{tpu_custom_call.1} parent=23 // pred_check
          %p111 = pneg %p44
        $region26: #{tpu_custom_call.1} parent=23 // pred_check_branch
          %113 = sbr.rel (%p111) target = $region28
        $region27: #{tpu_custom_call.1} parent=23 // pred_region
          %114 = dma.done [#allocation7], 256
        $region28: #{tpu_custom_call.1} parent=23 // pred_fallthru
          _
        %p115 = pneg %p44
        %p116 = pneg %p41
        %p117 = pneg %p72
        %p118 = pneg %p69
        %s119 = sand.u32 %s59, 1
        %s120 = scalar_lea.sflag [#allocation8], %s119
        %s121 = sand.u32 %s59, 1
        %s122 = smul.addr %s121, 16
        %s123 = scalar_lea.vmem [#allocation9], %s122
        %s124 = smul.u32 2, %s21
        %s125 = smul.u32 %s21, 16
        %p126 = scmp.eq.s32.totalorder %s20, 0
        %p127 = scmp.eq.s32.totalorder %s21, 0
        %p128 = pnand %p126, %p127
        %p129 = pneg %p128
        // Predicated region
        $region29: #{tpu_custom_call.1} parent=23 // pred_check
          _
        $region30: #{tpu_custom_call.1} parent=23 // pred_check_branch
          %131 = sbr.rel (%p128) target = $region32
        $region31: #{tpu_custom_call.1} parent=23 // pred_region
          %s132 = scalar_lea.smem [#allocation5], 0
          %133 = sst [smem:[%s132]] 0
        $region32: #{tpu_custom_call.1} parent=23 // pred_fallthru
          _
        // Predicated region
        $region33: #{tpu_custom_call.1} parent=23 // pred_check
          %p134 = pneg %p127
        $region34: #{tpu_custom_call.1} parent=23 // pred_check_branch
          %136 = sbr.rel (%p134) target = $region36
        $region35: #{tpu_custom_call.1} parent=23 // pred_region
          %137 = vst [vmem:[#allocation4] sm:$0xff] 0.0
        $region36: #{tpu_custom_call.1} parent=23 // pred_fallthru
          _
        %s138 = sld [smem:[#allocation5]]
        %p139 = scmp.eq.s32.totalorder %s138, 1
        %p140 = por %p126, %p139
        %s141 = scalar_lea.vmem [#allocation6], %s125
        %v142 = vld [vmem:[%s141] sm:$0xff]
        %v143 = vld [vmem:[%s141 + $0x8] sm:$0xff]
        %s144 = scalar_lea.vmem [#allocation2], %s125
        %v145 = vld [vmem:[%s144] sm:$0xff]
        %v146 = vld [vmem:[%s144 + $0x8] sm:$0xff]
        %s147 = scalar_select %p140, 1, 0
        %v148 = vstv %s147
        %vm149 = vcmp.eq.s32.totalorder %v148, 1
        %v150 = vsel %vm149, %v142, %v145
        %v151 = vsel %vm149, %v143, %v146
        %s152 = scalar_lea.vmem [#allocation3], %s125
        %v153 = vld [vmem:[%s152] sm:$0xff]
        %v154 = vld [vmem:[%s152 + $0x8] sm:$0xff]
        %s155 = scalar_select %p126, 1, 0
        %v156 = vstv %s155
        %vm157 = vcmp.eq.s32.totalorder %v156, 1
        %v158 = vsel %vm157, 0.0625, %v153
        %v159 = vsel %vm157, 0.0625, %v154
        %vm160 = vcmp.ge.f32.partialorder %v150, %v158
        %vm161 = vcmp.ge.f32.partialorder %v151, %v159
        %v162 = vsub.f32 %v150, %v158
        %v163 = vsub.f32 %v151, %v159
        %v164 = vsel %vm160, %v162, %v150
        %v165 = vsel %vm161, %v163, %v151
        %166 = vst [vmem:[%s144] sm:$0xff] %v164
        %167 = vst [vmem:[%s144 + $0x8] sm:$0xff] %v165
        %v168 = vmul.f32 %v158, 2.0
        %v169 = vmul.f32 %v159, 2.0
        %v170 = vsel %vm160, %v168, 0.0625
        %v171 = vsel %vm161, %v169, 0.0625
        %172 = vst [vmem:[%s152] sm:$0xff] %v170
        %173 = vst [vmem:[%s152 + $0x8] sm:$0xff] %v171
        %v174 = vsel %vm160, 1, 0
        %v175 = vsel %vm161, 1, 0
        %v176 = vcvt.s32.f32 %v174
        %v177 = vcvt.s32.f32 %v175
        %178 = vst [vmem:[%s123] sm:$0xff] %v176
        %179 = vst [vmem:[%s123 + $0x8] sm:$0xff] %v177
        %v180 = vmax.f32 %v176, %v177
        %v181 = vld [vmem:[#allocation4] sm:$0xff]
        %v182 = vmax.f32 %v181, %v180
        %183 = vst [vmem:[#allocation4] sm:$0xff] %v182
        // Predicated region
        $region37: #{tpu_custom_call.1} parent=23 // pred_check
          %p184 = pneg %p127
        $region38: #{tpu_custom_call.1} parent=23 // pred_check_branch
          %186 = sbr.rel (%p184) target = $region40
        $region39: #{tpu_custom_call.1} parent=23 // pred_region
          %187 = vmax.xlane.f32.xlu0 %v182
          %v188 = vpop.xlane.xlu0 %187
          %v189 = vrot.slane %v188, 4
          %v190 = vmax.f32 %v188, %v189
          %v191 = vrot.slane %v190, 2
          %v192 = vmax.f32 %v190, %v191
          %v193 = vrot.slane %v192, 1
          %v194 = vmax.f32 %v192, %v193
          %s195 = vtos %v194
          %p196 = scmp.eq.f32.partialorder %s195, 0.0
          %s197 = scalar_select %p196, 1, 0
          %s198 = scalar_lea.smem [#allocation5], 0
          %199 = sst [smem:[%s198]] %s197
        $region40: #{tpu_custom_call.1} parent=23 // pred_fallthru
          _
        %s200 = sand.u32 %s59, 1
        %s201 = scalar_lea.sflag [#allocation8], %s200
        %s202 = sand.u32 %s59, 1
        %s203 = smul.addr %s202, 16
        %s204 = scalar_lea.vmem [#allocation9], %s203
        // Predicated region
        $region41: #{tpu_custom_call.1} parent=23 // pred_check
          %p205 = pneg %p69
        $region42: #{tpu_custom_call.1} parent=23 // pred_check_branch
          %207 = sbr.rel (%p205) target = $region44
        $region43: #{tpu_custom_call.1} parent=23 // pred_region
          %s208 = smul.u32 2, %s21
          %s210 = ssub.s32 256, 256
          %211 = vsyncadd %s201, %s210
          %s212 = smul.addr %s20, 2
          %s213 = sadd.s32 %s208, %s212
          %s214 = smul.addr %s213, 128
          %s215 = scalar_lea.hbm %s1, %s214
          %s216 = sshll.u32 %s204, 4
          %s217 = int_to_ptr.vmem [resolvable:$true] %s216
          %222 = dma.vmem_to_hbm [thread:$0]  %s217, 256, %s215, %s201, 128, 128, 8
        $region44: #{tpu_custom_call.1} parent=23 // pred_fallthru
          _
      $region24: #{tpu_custom_call.1} parent=5 // pred_fallthru
        _
      %p223 = scmp.le.s32.totalorder 2, %s11
      // Predicated region
      $region45: #{tpu_custom_call.1} parent=5 // pred_check
        %p224 = pneg %p223
      $region46: #{tpu_custom_call.1} parent=5 // pred_check_branch
        %226 = sbr.rel (%p224) target = $region48
      $region47: #{tpu_custom_call.1} parent=5 // pred_region
        %s227 = ssub.s32 %s11, 2
        // Predicated region
        $region49: #{tpu_custom_call.1} parent=47 // pred_check
          %p228 = pneg %p75
        $region50: #{tpu_custom_call.1} parent=47 // pred_check_branch
          %230 = sbr.rel (%p228) target = $region52
        $region51: #{tpu_custom_call.1} parent=47 // pred_region
          %s231 = sand.u32 %s60, 1
          %s232 = scalar_lea.sflag [#allocation8], %s231
          %s233 = sand.u32 %s60, 1
          %s234 = smul.addr %s233, 16
          %s235 = scalar_lea.vmem [#allocation9], %s234
          %236 = dma.done %s232, 256
        $region52: #{tpu_custom_call.1} parent=47 // pred_fallthru
          _
      $region48: #{tpu_custom_call.1} parent=5 // pred_fallthru
        _
    $region6: #{tpu_custom_call.1} parent=1 // loop_footer
      %s15 = sadd.s32 1, %s11
    $region7: #{tpu_custom_call.1} parent=1 // loop_footer_branch
      %10 = sbr.rel target = $region3
    $region8: #{tpu_custom_call.1} parent=1 // loop_exit
      _
    %237 = vsyncpa [#allocation7], 1
    %s238 = scalar_lea.sflag [#allocation7], 1
    %239 = vsyncpa %s238, 1
    %240 = vsyncpa [#allocation8], 1
    %s241 = scalar_lea.sflag [#allocation8], 1
    %242 = vsyncpa %s241, 1

</llo_original>
